<compile_context>
chip_gen: v5e
topology: v5e:2x2
jax: 0.10.0
libtpu: 0.0.40
codegen_flags: <defaults>
</compile_context>

<pallas_src>
from typing import NamedTuple

import jax
import jax.numpy as jnp
from jax.experimental import pallas as pl
from jax.experimental.pallas import tpu as pltpu


def _round_up(x, m):
    return ((x + m - 1) // m) * m


# ----------------------------- Pallas kernels -------------------------------

def _solve_kernel_noacc(f_ref, opT_ref, u_ref):
    """nk == 1 fast path: single K block, write the MXU result directly."""
    u_ref[...] = jnp.dot(
        f_ref[...], opT_ref[...], preferred_element_type=jnp.float32
    ).astype(u_ref.dtype)


def _solve_kernel_acc(f_ref, opT_ref, u_ref, acc_ref):
    """K-streamed path: (batch-tile, out-tile, k-tile) with f32 accumulator."""

    @pl.when(pl.program_id(2) == 0)
    def _init():
        acc_ref[...] = jnp.zeros_like(acc_ref)

    acc_ref[...] += jnp.dot(
        f_ref[...], opT_ref[...], preferred_element_type=jnp.float32
    )

    @pl.when(pl.program_id(2) == pl.num_programs(2) - 1)
    def _finalize():
        u_ref[...] = acc_ref[...].astype(u_ref.dtype)


# ------------------------------ planning ------------------------------------

class SolvePlan(NamedTuple):
    n: int
    d: int
    n_pad: int
    d_pad: int
    tile_b: int
    tile_d: int
    tile_k: int
    compute_dtype: object
    out_dtype: object
    vmem_limit_bytes: int
    two_tc: bool


def _tpu_generation_defaults():
    """Per-generation VMEM block budget / scoped limit and TC-count hint."""
    kind = ""
    try:
        kind = jax.devices()[0].device_kind.lower()
    except Exception:
        kind = ""

    vmem_bytes = None
    try:
        info = pltpu.get_tpu_info()
        vmem_bytes = int(getattr(info, "vmem_capacity_bytes", 0)) or None
    except Exception:
        vmem_bytes = None
    if vmem_bytes is None:
        if ("v5" in kind) or ("v6" in kind):
            vmem_bytes = 128 * 1024 * 1024
        else:
            vmem_bytes = 64 * 1024 * 1024  # conservative (v7x / unknown)

    two_tc = ("v7" in kind) or ("tpu7" in kind)

    if vmem_bytes >= 96 * 1024 * 1024:
        # v5e / v6e: 128 MiB physical -> keep the (D, D) operator resident.
        budget = 64 * 1024 * 1024
        limit = 100 * 1024 * 1024
    else:
        # v7x / unknown: 64 MiB physical, 32 MiB scoped default.
        budget = 40 * 1024 * 1024
        limit = 48 * 1024 * 1024

    limit = min(limit, (vmem_bytes * 3) // 4)
    budget = max(16 * 1024 * 1024, min(budget, limit - 8 * 1024 * 1024))
    return budget, limit, two_tc


def plan_fenics_solve(n, d, *, out_dtype=jnp.float32, compute_dtype=None,
                      tile_b=None, tile_d=None, tile_k=None,
                      vmem_block_budget_bytes=None, vmem_limit_bytes=None):
    """Choose tile sizes / padding for the batched solve-operator matmul."""
    if compute_dtype is None:
        compute_dtype = out_dtype
    compute_dtype = jnp.dtype(compute_dtype)
    out_dtype = jnp.dtype(out_dtype)
    comp_size = compute_dtype.itemsize
    out_size = out_dtype.itemsize
    sublane = max(8, 32 // comp_size)  # 8 for f32, 16 for bf16

    auto_budget, auto_limit, two_tc = _tpu_generation_defaults()
    if vmem_block_budget_bytes is None:
        vmem_block_budget_bytes = auto_budget
    if vmem_limit_bytes is None:
        vmem_limit_bytes = auto_limit

    d128 = _round_up(d, 128)

    def largest_div_le(cap):
        # largest multiple-of-128 divisor of d128 that is <= cap
        cap = max(128, min(cap, d128))
        best, t = 128, 128
        while t <= cap:
            if d128 % t == 0:
                best = t
            t += 128
        return best

    tile_d = largest_div_le(d128 if tile_d is None else _round_up(tile_d, 128))
    tile_k = largest_div_le(d128 if tile_k is None else _round_up(tile_k, 128))

    n_pad = _round_up(n, sublane)
    if tile_b is None:
        tile_b = min(512, n_pad)
        # only 2-TC chips (v7x) benefit from forcing >= 2 batch grid steps
        if two_tc and 2 * 128 <= n_pad < 2 * tile_b:
            tile_b = 128
    tile_b = max(sublane, min(_round_up(tile_b, sublane), n_pad))

    def block_bytes(tb, td, tk):
        streamed = (d128 // tk) > 1
        op_bufs = 3 if streamed else 2  # Buffered(3) when K-streamed
        b = (2 * tb * tk * comp_size        # F tile, double buffered
             + op_bufs * tk * td * comp_size  # operator tile
             + 2 * tb * td * out_size)        # U tile, double buffered
        if streamed:
            b += tb * td * 4                  # f32 accumulator scratch
        return b

    # shrink tile_k first, then tile_d, then tile_b
    while block_bytes(tile_b, tile_d, tile_k) > vmem_block_budget_bytes:
        if tile_k > 128:
            tile_k = largest_div_le(tile_k // 2)
        elif tile_d > 128:
            tile_d = largest_div_le(tile_d // 2)
        elif tile_b > sublane:
            tile_b = max(sublane, tile_b // 2)
        else:
            break

    n_pad = _round_up(n_pad, tile_b)
    return SolvePlan(n, d, n_pad, d128, tile_b, tile_d, tile_k,
                     compute_dtype, out_dtype, vmem_limit_bytes, two_tc)


# --------------------------- operator preparation ---------------------------

def prepare_solve_operator(solve_op, plan):
    """Transpose + cast + pad the (D, D) solve operator ONCE (hoisted)."""
    d = plan.d
    assert solve_op.shape == (d, d)
    op_t = solve_op.T.astype(plan.compute_dtype)  # kernel computes F @ op^T
    pad = plan.d_pad - d
    if pad:
        op_t = jnp.pad(op_t, ((0, pad), (0, pad)))
    return op_t


# ------------------------------- forward ------------------------------------

def fenics_module_forward_prepped(f, op_prepped, plan):
    """Batched linear FE solve  U = F @ op^T  using a pre-prepped operator."""
    n, d = f.shape
    assert (n, d) == (plan.n, plan.d)
    assert op_prepped.shape == (plan.d_pad, plan.d_pad)

    f_p = f.astype(plan.compute_dtype)
    if plan.n_pad != n or plan.d_pad != d:
        f_p = jnp.pad(f_p, ((0, plan.n_pad - n), (0, plan.d_pad - d)))

    tb, td, tk = plan.tile_b, plan.tile_d, plan.tile_k
    nb = plan.n_pad // tb
    nj = plan.d_pad // td
    nk = plan.d_pad // tk
    comp_size = plan.compute_dtype.itemsize
    out_size = plan.out_dtype.itemsize

    # F is re-read nj times only when K is streamed; the operator is re-read
    # per batch tile only when it is tiled at all.
    f_bytes = (nj if nk > 1 else 1) * plan.n_pad * plan.d_pad * comp_size
    op_bytes = (nb if (nj * nk) > 1 else 1) * plan.d_pad * plan.d_pad * comp_size
    cost = pl.CostEstimate(
        flops=2 * plan.n_pad * plan.d_pad * plan.d_pad,
        transcendentals=0,
        bytes_accessed=f_bytes + op_bytes + plan.n_pad * plan.d_pad * out_size,
    )

    out_shape = jax.ShapeDtypeStruct((plan.n_pad, plan.d_pad), plan.out_dtype)

    if nk == 1:
        # Operator fits in one K block: no accumulator, no scratch.
        out_p = pl.pallas_call(
            _solve_kernel_noacc,
            out_shape=out_shape,
            grid_spec=pltpu.PrefetchScalarGridSpec(
                num_scalar_prefetch=0,
                grid=(nb, nj),
                in_specs=[
                    pl.BlockSpec((tb, tk), lambda i, j: (i, 0)),  # F tile
                    pl.BlockSpec((tk, td), lambda i, j: (0, j)),  # op tile
                ],
                out_specs=pl.BlockSpec((tb, td), lambda i, j: (i, j)),
            ),
            compiler_params=pltpu.CompilerParams(
                dimension_semantics=("parallel", "parallel"),
                vmem_limit_bytes=plan.vmem_limit_bytes,
            ),
            cost_estimate=cost,
        )(f_p, op_prepped)
    else:
        # Large D: K-streamed operator with deeper prefetch + f32 accumulator.
        out_p = pl.pallas_call(
            _solve_kernel_acc,
            out_shape=out_shape,
            grid_spec=pltpu.PrefetchScalarGridSpec(
                num_scalar_prefetch=0,
                grid=(nb, nj, nk),
                in_specs=[
                    pl.BlockSpec((tb, tk), lambda i, j, k: (i, k)),
                    pl.BlockSpec((tk, td), lambda i, j, k: (k, j),
                                 pipeline_mode=pl.Buffered(3)),
                ],
                out_specs=pl.BlockSpec((tb, td), lambda i, j, k: (i, j)),
                scratch_shapes=[pltpu.VMEM((tb, td), jnp.float32)],
            ),
            compiler_params=pltpu.CompilerParams(
                dimension_semantics=("parallel", "parallel", "arbitrary"),
                vmem_limit_bytes=plan.vmem_limit_bytes,
            ),
            cost_estimate=cost,
        )(f_p, op_prepped)

    return out_p[:n, :d]


def fenics_module_forward(f, solve_op, **plan_kwargs):
    """Convenience one-shot path (plans + preps the operator per call)."""
    n, d = f.shape
    plan = plan_fenics_solve(n, d, out_dtype=f.dtype, **plan_kwargs)
    op_prepped = prepare_solve_operator(solve_op, plan)
    return fenics_module_forward_prepped(f, op_prepped, plan)


# --------------------- deterministic "PDE" parameter setup ------------------

def make_poisson_solve_operator(n_dof):
    """Fixed linear solve operator K^{-1} M for 1-D Poisson on [0, 1] with
    n_dof interior P1 nodes and homogeneous Dirichlet BCs.

    NOTE: torch-fenics works in float64; this f32 dense inverse-apply is only
    accurate for moderate n_dof (cond(K) ~ O(n_dof^2)).
    """
    h = 1.0 / (n_dof + 1)
    main = jnp.eye(n_dof, dtype=jnp.float32)
    off_lo = jnp.eye(n_dof, k=-1, dtype=jnp.float32)
    off_hi = jnp.eye(n_dof, k=1, dtype=jnp.float32)
    # stiffness K = (1/h) * tridiag(-1, 2, -1)
    K = (2.0 * main - off_lo - off_hi) / h
    # mass M = (h/6) * tridiag(1, 4, 1)
    M = (4.0 * main + off_lo + off_hi) * (h / 6.0)
    solve_op = jnp.linalg.solve(K, M)  # (D, D)
    return solve_op.astype(jnp.float32)


# ----------------------------------- main -----------------------------------

if __name__ == "__main__":
    batch = 8      # N: number of independent PDE solves in the batch
    n_dof = 128    # D: degrees of freedom of the FE function space

    key = jax.random.PRNGKey(0)
    # batched source term f, shape (N, D)  (torch-fenics "N x M_1" convention)
    f = jax.random.normal(key, (batch, n_dof), dtype=jnp.float32)

    solve_op = make_poisson_solve_operator(n_dof)

    # hoisted operator prep (done once, outside the per-call hot path)
    plan = plan_fenics_solve(batch, n_dof, out_dtype=f.dtype)
    op_prepped = jax.block_until_ready(prepare_solve_operator(solve_op, plan))

    fwd = jax.jit(lambda x: fenics_module_forward_prepped(x, op_prepped, plan))
    u = jax.block_until_ready(fwd(f))

    # correctness check against the plain-JAX reference of the stacked solves
    u_ref = jax.block_until_ready(f @ solve_op.T)
    assert u.shape == (batch, n_dof)
    assert jnp.allclose(u, u_ref, atol=1e-4, rtol=1e-4)

    print("KERNEL_OK")
</pallas_src>

<mosaic_0001>
module attributes {stable_mosaic.version = 11 : i64} {
  func.func @_solve_kernel_noacc(%arg0: i32, %arg1: i32, %arg2: memref<8x128xf32, #tpu.memory_space<vmem>>, %arg3: memref<128x128xf32, #tpu.memory_space<vmem>>, %arg4: memref<8x128xf32, #tpu.memory_space<vmem>>) attributes {dimension_semantics = [#tpu.dimension_semantics<parallel>, #tpu.dimension_semantics<parallel>], iteration_bounds = array<i64: 1, 1>, scalar_prefetch = 0 : i64, scratch_operands = 0 : i64, tpu.core_type = #tpu.core_type<tc>, window_params = [{transform_indices = @transform_0, window_bounds = array<i64: 8, 128>}, {transform_indices = @transform_1, window_bounds = array<i64: 128, 128>}, {transform_indices = @transform_2, window_bounds = array<i64: 8, 128>}]} {
    %c0 = arith.constant 0 : index
    %c0_0 = arith.constant 0 : index
    %0 = vector.load %arg2[%c0, %c0_0] : memref<8x128xf32, #tpu.memory_space<vmem>>, vector<8x128xf32>
    %c0_1 = arith.constant 0 : index
    %c0_2 = arith.constant 0 : index
    %1 = vector.load %arg3[%c0_1, %c0_2] : memref<128x128xf32, #tpu.memory_space<vmem>>, vector<128x128xf32>
    %cst = arith.constant dense<0.000000e+00> : vector<8x128xf32>
    %2 = tpu.matmul %0, %1, %cst {dimension_numbers = #tpu.dot_dimension_numbers<[1], [0], [0], [1], [0, 0, 1, 1], [], []>} : vector<8x128xf32>, vector<128x128xf32>, vector<8x128xf32> -> vector<8x128xf32>
    %c0_3 = arith.constant 0 : index
    %c0_4 = arith.constant 0 : index
    %3 = vector.load %arg4[%c0_3, %c0_4] : memref<8x128xf32, #tpu.memory_space<vmem>>, vector<8x128xf32>
    tpu.vector_store %arg4[%c0_3, %c0_4], %2 {strides = array<i32>} : memref<8x128xf32, #tpu.memory_space<vmem>>, vector<8x128xf32>,
    return
  }
  func.func @transform_0(%arg0: i32, %arg1: i32) -> (i32, i32) {
    %c0_i32 = arith.constant 0 : i32
    %c0_i32_0 = arith.constant 0 : i32
    return %arg0, %c0_i32 : i32, i32
  }
  func.func @transform_1(%arg0: i32, %arg1: i32) -> (i32, i32) {
    %c0_i32 = arith.constant 0 : i32
    %c0_i32_0 = arith.constant 0 : i32
    return %c0_i32, %arg1 : i32, i32
  }
  func.func @transform_2(%arg0: i32, %arg1: i32) -> (i32, i32) {
    %c0_i32 = arith.constant 0 : i32
    return %arg0, %arg1 : i32, i32
  }
}

</mosaic_0001>

<llo_original>
// kernel: _lambda_.1
$region0: #{_lambda_.1}
  #allocation0 [shape = 'u32[]', space=smem, size = 0x4, offset = 0x4, fixed_abs, tag = 'smem constant byte address 0x4 - core index']
  #allocation1 [shape = 'u32[72,128]{1,0:T(1,128)}', space=vmem, size = 0x9000, scoped, tag = 'internal scratch']
  %s0 = inlined_call_operand.hbm [shape: f32[8,128], index: 0, kind: input, shape index: {}]
  %s1 = inlined_call_operand.hbm [shape: f32[128,128], index: 1, kind: input, shape index: {}]
  %s2 = inlined_call_operand.hbm [shape: f32[8,128], index: 2, kind: output, shape index: {}]
  %s3 = sld [smem:[#allocation0]]
  $region26: #{_lambda_.1} parent=0
    _
  %s5 = ssub.s32 1, %s3
  %s6 = scalar_select 0, %s5, %s3
  $region1: #{_lambda_.1} parent=0
    #allocation2 [shape = 'u8[4096]{0}', space=vmem, size = 0x1000, scoped, tag = 'input window, operand 0, single buffered']
    #allocation3 [shape = 's32[1]{0}', space=sflag, size = 0x4, scoped, tag = 'scoped memory for _lambda_.1']
    #allocation4 [shape = 's32[1]{0}', space=sflag, size = 0x4, scoped, tag = 'scoped memory for _lambda_.1']
    #allocation5 [shape = 'u8[65536]{0}', space=vmem, size = 0x10000, scoped, tag = 'input window, operand 1, single buffered']
    #allocation6 [shape = 's32[1]{0}', space=sflag, size = 0x4, scoped, tag = 'scoped memory for _lambda_.1']
    #allocation7 [shape = 'u8[4096]{0}', space=vmem, size = 0x1000, scoped, tag = 'output window, operand 0, single buffered']
    %7 = vsyncpa [#allocation3], 0
    %8 = vsyncpa [#allocation6], 0
    %9 = vsyncpa [#allocation4], 0
    // Predicated region
    $region2: #{_lambda_.1} parent=1 // pred_check
      _
    $region3: #{_lambda_.1} parent=1 // pred_check_branch
      %11 = sbr.rel (0) target = $region5
    $region4: #{_lambda_.1} parent=1 // pred_region
      %13 = vsyncadd [#allocation3], 0
      %s15 = sshll.u32 %s0, 4
      %s16 = int_to_ptr.hbm [resolvable:$true] %s15
      %s17 = sshll.u32 [#allocation2], 4
      %s18 = int_to_ptr.vmem [resolvable:$true] %s17
      %20 = dma.hbm_to_vmem [thread:$0]  %s16, 128, %s18, [#allocation3]
    $region5: #{_lambda_.1} parent=1 // pred_fallthru
      _
    // Predicated region
    $region6: #{_lambda_.1} parent=1 // pred_check
      _
    $region7: #{_lambda_.1} parent=1 // pred_check_branch
      %22 = sbr.rel (0) target = $region9
    $region8: #{_lambda_.1} parent=1 // pred_region
      %24 = vsyncadd [#allocation6], 0
      %s25 = sshll.u32 %s1, 4
      %s26 = int_to_ptr.hbm [resolvable:$true] %s25
      %s27 = sshll.u32 [#allocation5], 4
      %s28 = int_to_ptr.vmem [resolvable:$true] %s27
      %33 = dma.hbm_to_vmem [thread:$0]  %s26, 2048, %s28, [#allocation6], 128, 128, 8
    $region9: #{_lambda_.1} parent=1 // pred_fallthru
      _
    // Predicated region
    $region10: #{_lambda_.1} parent=1 // pred_check
      _
    $region11: #{_lambda_.1} parent=1 // pred_check_branch
      %35 = sbr.rel (0) target = $region13
    $region12: #{_lambda_.1} parent=1 // pred_region
      %37 = dma.done [#allocation3], 128
    $region13: #{_lambda_.1} parent=1 // pred_fallthru
      _
    // Predicated region
    $region14: #{_lambda_.1} parent=1 // pred_check
      _
    $region15: #{_lambda_.1} parent=1 // pred_check_branch
      %39 = sbr.rel (0) target = $region17
    $region16: #{_lambda_.1} parent=1 // pred_region
      %41 = dma.done [#allocation6], 2048
    $region17: #{_lambda_.1} parent=1 // pred_fallthru
      _
    %v42 = vld [vmem:[#allocation2] sm:$0xff]
    %v43 = vld [vmem:[#allocation5] sm:$0xff]
    %v44 = vld [vmem:[#allocation5 + $0x8] sm:$0xff]
    %v45 = vld [vmem:[#allocation5 + $0x10] sm:$0xff]
    %v46 = vld [vmem:[#allocation5 + $0x18] sm:$0xff]
    %v47 = vld [vmem:[#allocation5 + $0x20] sm:$0xff]
    %v48 = vld [vmem:[#allocation5 + $0x28] sm:$0xff]
    %v49 = vld [vmem:[#allocation5 + $0x30] sm:$0xff]
    %v50 = vld [vmem:[#allocation5 + $0x38] sm:$0xff]
    %v51 = vld [vmem:[#allocation5 + $0x40] sm:$0xff]
    %v52 = vld [vmem:[#allocation5 + $0x48] sm:$0xff]
    %v53 = vld [vmem:[#allocation5 + $0x50] sm:$0xff]
    %v54 = vld [vmem:[#allocation5 + $0x58] sm:$0xff]
    %v55 = vld [vmem:[#allocation5 + $0x60] sm:$0xff]
    %v56 = vld [vmem:[#allocation5 + $0x68] sm:$0xff]
    %v57 = vld [vmem:[#allocation5 + $0x70] sm:$0xff]
    %v58 = vld [vmem:[#allocation5 + $0x78] sm:$0xff]
    %59 = vmatpush.msra.mxu0 %v58
    %60 = vmatpush.msra.mxu0 %v57
    %61 = vmatpush.msra.mxu0 %v56
    %62 = vmatpush.msra.mxu0 %v55
    %63 = vmatpush.msra.mxu0 %v54
    %64 = vmatpush.msra.mxu0 %v53
    %65 = vmatpush.msra.mxu0 %v52
    %66 = vmatpush.msra.mxu0 %v51
    %67 = vmatpush.msra.mxu0 %v50
    %68 = vmatpush.msra.mxu0 %v49
    %69 = vmatpush.msra.mxu0 %v48
    %70 = vmatpush.msra.mxu0 %v47
    %71 = vmatpush.msra.mxu0 %v46
    %72 = vmatpush.msra.mxu0 %v45
    %73 = vmatpush.msra.mxu0 %v44
    %74 = vmatpush.msra.mxu0 %v43
    %75 = vmatmul.f32.gmra.mxu0 %v42
    %v76 = vpop.f32.mrf.mxu0
    %v77 = vadd.f32 0.0, %v76
    %78 = vdwg.mxu0
    %79 = vst [vmem:[#allocation7] sm:$0xff] %v77
    // Predicated region
    $region18: #{_lambda_.1} parent=1 // pred_check
      _
    $region19: #{_lambda_.1} parent=1 // pred_check_branch
      %81 = sbr.rel (0) target = $region21
    $region20: #{_lambda_.1} parent=1 // pred_region
      %83 = vsyncadd [#allocation4], 0
      %s85 = sshll.u32 [#allocation7], 4
      %s86 = int_to_ptr.vmem [resolvable:$true] %s85
      %s87 = sshll.u32 %s2, 4
      %s88 = int_to_ptr.hbm [resolvable:$true] %s87
      %90 = dma.vmem_to_hbm [thread:$0]  %s86, 128, %s88, [#allocation4]
    $region21: #{_lambda_.1} parent=1 // pred_fallthru
      _
    // Predicated region
    $region22: #{_lambda_.1} parent=1 // pred_check
      _
    $region23: #{_lambda_.1} parent=1 // pred_check_branch
      %92 = sbr.rel (0) target = $region25
    $region24: #{_lambda_.1} parent=1 // pred_region
      %94 = dma.done [#allocation4], 128
    $region25: #{_lambda_.1} parent=1 // pred_fallthru
      _
    %95 = vsyncpa [#allocation3], 1
    %96 = vsyncpa [#allocation6], 1
    %97 = vsyncpa [#allocation4], 1

</llo_original>
